<compile_context>
chip_gen: v5e
topology: v5e:2x2
jax: 0.10.0
libtpu: 0.0.40
codegen_flags: <defaults>
</compile_context>

<pallas_src>
import functools

import jax
import jax.numpy as jnp
from jax.experimental import pallas as pl
from jax.experimental.pallas import tpu as pltpu

# Sublane multiple required for the second-minor dim, by dtype itemsize.
_SUBLANE = {4: 8, 2: 16, 1: 32}
# Conservative budget for the double-buffered W slab so the same tiles fit
# v7x's 64 MiB VMEM as well as v5e/v6e's 128 MiB.
_W_BUDGET_BYTES = 24 * 1024 * 1024
# MXU-friendly batch-tile cap (multiple of 128/256); also caps accumulator VMEM.
_MAX_TB = 256


def _round_up(x, m):
    return (x + m - 1) // m * m


def _k_tiling(cin_aug, n, itemsize):
    """Deterministic (padded_K, K_tile) rule shared by prepare + wrapper."""
    sub = _SUBLANE[itemsize]
    small_pad = _round_up(cin_aug, sub)
    if cin_aug <= 512 and 2 * small_pad * n * itemsize <= _W_BUDGET_BYTES:
        return small_pad, small_pad            # single K slab, no K grid steps
    cin_pad = _round_up(cin_aug, 128)
    for tk in (512, 384, 256, 128):            # multiples of 128 (lane dense)
        if cin_pad % tk == 0 and 2 * tk * n * itemsize <= _W_BUDGET_BYTES:
            return cin_pad, tk
    return cin_pad, 128


def _moe_mlp_kernel(x_ref, coef_ref, w_ref, o_ref, acc_ref, *, num_experts,
                    out_channels):
    k = pl.program_id(1)

    @pl.when(k == 0)
    def _init():
        acc_ref[...] = jnp.zeros_like(acc_ref)

    # One lane-dense canonical matmul per step: [tb, tk] x [tk, E*Cout],
    # fp32 accumulation on the MXU.  Bias is already folded into W (the
    # constant-1 column of x multiplies the bias row), so no extra epilogue
    # matmul or bias DMA stream is needed.
    acc_ref[...] += jnp.dot(x_ref[...], w_ref[...],
                            preferred_element_type=jnp.float32)

    @pl.when(k == pl.num_programs(1) - 1)
    def _epilogue():
        c = coef_ref[...].astype(jnp.float32)       # [tb, E]
        y = acc_ref[...]                            # [tb, E*Cout] fp32
        # Weighted sum over experts: E is small -> static unrolled VPU loop.
        # When E*Cout is a multiple of 128 these lane slices are vreg-aligned;
        # for small Cout they cost XLU rotates, acceptable because the XLU is
        # otherwise idle in this epilogue.
        out = y[:, :out_channels] * c[:, 0:1]
        for e in range(1, num_experts):
            out = out + (y[:, e * out_channels:(e + 1) * out_channels]
                         * c[:, e:e + 1])
        # TODO(synk): when Cout < 128 this (tb, Cout) store lowers to masked
        # partial stores (vst.msk); a lane-dense grouped output slab would
        # remove that cost (matters most on v5e's single store slot).
        o_ref[...] = out.astype(o_ref.dtype)


def prepare_moe_params(w, b, stream_dtype=None):
    """One-time relayout of module params into the kernel's canonical matrix.

    Returns w_aug of shape [Cin_pad, E*Cout] with
        w_aug[i,  e*Cout + j] = w[e, j, i]   for i < Cin
        w_aug[Cin, e*Cout + j] = b[e, j]     (bias row, hit by the constant-1
                                              column appended to x)
        zeros beyond row Cin.

    Call this ONCE at parameter-load time.  Doing the transpose/reshape inside
    the forward would make XLA re-materialize a full relayout copy of W in HBM
    on every call, ~2-3x-ing weight-side HBM traffic in the small-B regime.
    """
    E, Cout, Cin = w.shape
    N = E * Cout
    dtype = jnp.dtype(w.dtype if stream_dtype is None else stream_dtype)
    w_flat = jnp.transpose(w, (2, 0, 1)).reshape(Cin, N)    # [Cin, E*Cout]
    b_row = b.reshape(1, N).astype(w_flat.dtype)            # e-major, matches
    w_aug = jnp.concatenate([w_flat, b_row], axis=0)        # [Cin+1, N]
    cin_pad, _ = _k_tiling(Cin + 1, N, dtype.itemsize)
    w_aug = jnp.pad(w_aug, ((0, cin_pad - (Cin + 1)), (0, 0)))
    return w_aug.astype(dtype)


@functools.partial(jax.jit, static_argnames=("block_b", "block_k"))
def moe_mlp_block(x, coef, w_aug, *, block_b=None, block_k=None):
    """MoE MLP forward.

    x:     [..., Cin]
    coef:  [..., E]
    w_aug: [Cin_pad, E*Cout]  from prepare_moe_params(w, b, stream_dtype)
    returns [..., Cout] in x.dtype.
    """
    lead = x.shape[:-1]
    Cin = x.shape[-1]
    E = coef.shape[-1]
    cin_pad, N = w_aug.shape
    Cout = N // E
    out_dtype = x.dtype
    stream_dtype = w_aug.dtype            # x is streamed in the same dtype so
    itemsize = jnp.dtype(stream_dtype).itemsize  # the MXU fast path is used.
    sub = _SUBLANE[itemsize]

    # K tiling must reproduce the rule used in prepare_moe_params.
    cin_pad_chk, tk = _k_tiling(Cin + 1, N, itemsize)
    assert cin_pad_chk == cin_pad, (
        "w_aug was not produced by prepare_moe_params for this x shape/dtype")
    if block_k is not None:
        assert cin_pad % block_k == 0, "block_k must divide padded Cin"
        tk = block_k

    x2 = x.reshape(-1, Cin).astype(stream_dtype)
    coef2 = coef.reshape(-1, E).astype(jnp.float32)
    B = x2.shape[0]

    # Batch tiling: capped, sublane-aligned.  Multiple B tiles on the
    # "parallel" axis shard across the 2nd TensorCore on v7x; maximizing tb
    # (within VMEM) amortizes the per-B-tile W re-stream.
    # TODO(synk): gate a "force >= 2 B tiles" heuristic on chip generation.
    if block_b is not None:
        assert block_b % sub == 0, "block_b must be sublane-aligned"
        tb = block_b
    else:
        tb = min(_round_up(B, sub), _MAX_TB)
    b_pad = _round_up(B, tb)

    # Augmented activations: [x | 1 | 0...]; the 1-column picks up the folded
    # bias row, so bias is applied exactly once with no epilogue matmul.
    pieces = [x2, jnp.ones((B, 1), stream_dtype)]
    if cin_pad - Cin - 1 > 0:
        pieces.append(jnp.zeros((B, cin_pad - Cin - 1), stream_dtype))
    x_aug = jnp.concatenate(pieces, axis=-1)
    if b_pad != B:
        x_aug = jnp.pad(x_aug, ((0, b_pad - B), (0, 0)))
        coef2 = jnp.pad(coef2, ((0, b_pad - B), (0, 0)))

    grid = (b_pad // tb, cin_pad // tk)

    # Explicit VMEM budget (default scoped limit is only 16/32 MiB; v7x has
    # just 64 MiB physical VMEM, so cap with headroom).
    est = (2 * tb * tk * itemsize          # x double buffer
           + 2 * tk * N * itemsize         # W double buffer
           + 2 * tb * E * 4                # coef double buffer
           + tb * N * 4                    # fp32 accumulator scratch
           + 2 * tb * Cout * jnp.dtype(out_dtype).itemsize)   # out buffers
    try:
        cap = int(pltpu.get_tpu_info().vmem_capacity_bytes)
    except Exception:
        cap = 64 * 1024 * 1024
    vmem_limit = int(min(max(2 * est, 32 * 1024 * 1024), (3 * cap) // 4))

    cost = pl.CostEstimate(
        flops=2 * b_pad * cin_pad * N,
        transcendentals=0,
        bytes_accessed=(b_pad * cin_pad * itemsize                 # x
                        + (b_pad // tb) * cin_pad * N * itemsize   # W streams
                        + b_pad * E * 4                            # coef
                        + b_pad * Cout * jnp.dtype(out_dtype).itemsize))

    kernel = functools.partial(_moe_mlp_kernel, num_experts=E,
                               out_channels=Cout)

    out = pl.pallas_call(
        kernel,
        out_shape=jax.ShapeDtypeStruct((b_pad, Cout), out_dtype),
        grid_spec=pltpu.PrefetchScalarGridSpec(
            num_scalar_prefetch=0,
            grid=grid,
            in_specs=[
                pl.BlockSpec((tb, tk), lambda i, k: (i, k)),   # x tile
                pl.BlockSpec((tb, E), lambda i, k: (i, 0)),    # coef (resident)
                pl.BlockSpec((tk, N), lambda i, k: (k, 0)),    # W K-slab
            ],
            out_specs=pl.BlockSpec((tb, Cout), lambda i, k: (i, 0)),
            scratch_shapes=[pltpu.VMEM((tb, N), jnp.float32)],  # per-tile acc
        ),
        compiler_params=pltpu.CompilerParams(
            dimension_semantics=("parallel", "arbitrary"),
            vmem_limit_bytes=vmem_limit),
        cost_estimate=cost,
    )(x_aug, coef2, w_aug)

    return out[:B].reshape(*lead, Cout)


def moe_mlp_reference(x, coef, w, b):
    # Direct transcription of the torch forward (for verification).
    w_mix = jnp.einsum('bi,ijk->bjk', coef, w)
    b_mix = jnp.einsum('bi,ik->bk', coef, b)
    return jnp.einsum('bk,bjk->bj', x, w_mix) + b_mix


if __name__ == "__main__":
    # Small shapes consistent with forward(x: [B, in_channels], coef: [B, E]).
    B = 8
    in_channels = 32
    out_channels = 32
    num_experts = 4

    key = jax.random.PRNGKey(0)
    kx, kc, kw, kb = jax.random.split(key, 4)

    x = jax.random.normal(kx, (B, in_channels), dtype=jnp.float32)
    coef = jax.nn.softmax(
        jax.random.normal(kc, (B, num_experts), dtype=jnp.float32), axis=-1)

    # Parameter init mirroring the module's __init__ (nonzero bias to exercise
    # the folded-bias path).
    w_bound = (6.0 / (in_channels * out_channels)) ** 0.5
    w = jax.random.uniform(kw, (num_experts, out_channels, in_channels),
                           dtype=jnp.float32, minval=-w_bound, maxval=w_bound)
    b = 0.1 * jax.random.normal(kb, (num_experts, out_channels),
                                dtype=jnp.float32)

    ref = moe_mlp_reference(x, coef, w, b)

    # fp32 path (weight relayout hoisted out of the forward, done once here).
    w_aug = prepare_moe_params(w, b)
    out = jax.block_until_ready(moe_mlp_block(x, coef, w_aug))
    assert out.shape == (B, out_channels)
    assert jnp.allclose(out, ref, atol=1e-5, rtol=1e-5), "fp32 mismatch"

    # bf16 streaming path: weights + activations streamed narrow (halves HBM
    # traffic in the bandwidth-bound small-B regime), fp32 MXU accumulation.
    w_aug_bf16 = prepare_moe_params(w, b, stream_dtype=jnp.bfloat16)
    out_bf16 = jax.block_until_ready(moe_mlp_block(x, coef, w_aug_bf16))
    assert out_bf16.shape == (B, out_channels)
    assert jnp.allclose(out_bf16, ref, atol=3e-2, rtol=3e-2), "bf16 mismatch"

    print("KERNEL_OK")
</pallas_src>

<mosaic_0001>
module attributes {stable_mosaic.version = 11 : i64} {
  func.func @_moe_mlp_kernel(%arg0: i32, %arg1: i32, %arg2: memref<8x40xf32, #tpu.memory_space<vmem>>, %arg3: memref<8x4xf32, #tpu.memory_space<vmem>>, %arg4: memref<40x128xf32, #tpu.memory_space<vmem>>, %arg5: memref<8x32xf32, #tpu.memory_space<vmem>>, %arg6: memref<8x128xf32, #tpu.memory_space<vmem>>) attributes {dimension_semantics = [#tpu.dimension_semantics<parallel>, #tpu.dimension_semantics<arbitrary>], iteration_bounds = array<i64: 1, 1>, scalar_prefetch = 0 : i64, scratch_operands = 1 : i64, tpu.core_type = #tpu.core_type<tc>, window_params = [{transform_indices = @transform_0, window_bounds = array<i64: 8, 40>}, {transform_indices = @transform_1, window_bounds = array<i64: 8, 4>}, {transform_indices = @transform_2, window_bounds = array<i64: 40, 128>}, {transform_indices = @transform_3, window_bounds = array<i64: 8, 32>}]} {
    %c0_i32 = arith.constant 0 : i32
    %0 = arith.cmpi eq, %arg1, %c0_i32 : i32
    %1 = arith.extui %0 : i1 to i32
    %c0_i32_0 = arith.constant 0 : i32
    %2 = arith.cmpi ne, %1, %c0_i32_0 : i32
    scf.if %2 {
      %cst_10 = arith.constant 0.000000e+00 : f32
      %12 = vector.broadcast %cst_10 : f32 to vector<8x128xf32>
      %c0_11 = arith.constant 0 : index
      %c0_12 = arith.constant 0 : index
      %13 = vector.load %arg6[%c0_11, %c0_12] : memref<8x128xf32, #tpu.memory_space<vmem>>, vector<8x128xf32>
      tpu.vector_store %arg6[%c0_11, %c0_12], %12 {strides = array<i32>} : memref<8x128xf32, #tpu.memory_space<vmem>>, vector<8x128xf32>,
    } else {
    }
    %c0 = arith.constant 0 : index
    %c0_1 = arith.constant 0 : index
    %3 = vector.load %arg6[%c0, %c0_1] : memref<8x128xf32, #tpu.memory_space<vmem>>, vector<8x128xf32>
    %c0_2 = arith.constant 0 : index
    %c0_3 = arith.constant 0 : index
    %4 = vector.load %arg2[%c0_2, %c0_3] : memref<8x40xf32, #tpu.memory_space<vmem>>, vector<8x40xf32>
    %c0_4 = arith.constant 0 : index
    %c0_5 = arith.constant 0 : index
    %5 = vector.load %arg4[%c0_4, %c0_5] : memref<40x128xf32, #tpu.memory_space<vmem>>, vector<40x128xf32>
    %cst = arith.constant dense<0.000000e+00> : vector<8x128xf32>
    %6 = tpu.matmul %4, %5, %cst {dimension_numbers = #tpu.dot_dimension_numbers<[1], [0], [0], [1], [0, 0, 1, 1], [], []>} : vector<8x40xf32>, vector<40x128xf32>, vector<8x128xf32> -> vector<8x128xf32>
    %7 = arith.addf %3, %6 : vector<8x128xf32>
    %c0_6 = arith.constant 0 : index
    %c0_7 = arith.constant 0 : index
    %8 = vector.load %arg6[%c0_6, %c0_7] : memref<8x128xf32, #tpu.memory_space<vmem>>, vector<8x128xf32>
    tpu.vector_store %arg6[%c0_6, %c0_7], %7 {strides = array<i32>} : memref<8x128xf32, #tpu.memory_space<vmem>>, vector<8x128xf32>,
    %c0_i32_8 = arith.constant 0 : i32
    %9 = arith.cmpi eq, %arg1, %c0_i32_8 : i32
    %10 = arith.extui %9 : i1 to i32
    %c0_i32_9 = arith.constant 0 : i32
    %11 = arith.cmpi ne, %10, %c0_i32_9 : i32
    scf.if %11 {
      %c0_10 = arith.constant 0 : index
      %c0_11 = arith.constant 0 : index
      %12 = vector.load %arg3[%c0_10, %c0_11] : memref<8x4xf32, #tpu.memory_space<vmem>>, vector<8x4xf32>
      %c0_12 = arith.constant 0 : index
      %c0_13 = arith.constant 0 : index
      %13 = vector.load %arg6[%c0_12, %c0_13] : memref<8x128xf32, #tpu.memory_space<vmem>>, vector<8x128xf32>
      %14 = vector.extract_strided_slice %13 {offsets = [0, 0], sizes = [8, 32], strides = [1, 1]} : vector<8x128xf32> to vector<8x32xf32>
      %15 = vector.extract_strided_slice %12 {offsets = [0, 0], sizes = [8, 1], strides = [1, 1]} : vector<8x4xf32> to vector<8x1xf32>
      %16 = vector.broadcast %15 : vector<8x1xf32> to vector<8x32xf32>
      %17 = arith.mulf %14, %16 : vector<8x32xf32>
      %18 = vector.extract_strided_slice %13 {offsets = [0, 32], sizes = [8, 32], strides = [1, 1]} : vector<8x128xf32> to vector<8x32xf32>
      %19 = vector.extract_strided_slice %12 {offsets = [0, 1], sizes = [8, 1], strides = [1, 1]} : vector<8x4xf32> to vector<8x1xf32>
      %20 = vector.broadcast %19 : vector<8x1xf32> to vector<8x32xf32>
      %21 = arith.mulf %18, %20 : vector<8x32xf32>
      %22 = arith.addf %17, %21 : vector<8x32xf32>
      %23 = vector.extract_strided_slice %13 {offsets = [0, 64], sizes = [8, 32], strides = [1, 1]} : vector<8x128xf32> to vector<8x32xf32>
      %24 = vector.extract_strided_slice %12 {offsets = [0, 2], sizes = [8, 1], strides = [1, 1]} : vector<8x4xf32> to vector<8x1xf32>
      %25 = vector.broadcast %24 : vector<8x1xf32> to vector<8x32xf32>
      %26 = arith.mulf %23, %25 : vector<8x32xf32>
      %27 = arith.addf %22, %26 : vector<8x32xf32>
      %28 = vector.extract_strided_slice %13 {offsets = [0, 96], sizes = [8, 32], strides = [1, 1]} : vector<8x128xf32> to vector<8x32xf32>
      %29 = vector.extract_strided_slice %12 {offsets = [0, 3], sizes = [8, 1], strides = [1, 1]} : vector<8x4xf32> to vector<8x1xf32>
      %30 = vector.broadcast %29 : vector<8x1xf32> to vector<8x32xf32>
      %31 = arith.mulf %28, %30 : vector<8x32xf32>
      %32 = arith.addf %27, %31 : vector<8x32xf32>
      %c0_14 = arith.constant 0 : index
      %c0_15 = arith.constant 0 : index
      %33 = vector.load %arg5[%c0_14, %c0_15] : memref<8x32xf32, #tpu.memory_space<vmem>>, vector<8x32xf32>
      tpu.vector_store %arg5[%c0_14, %c0_15], %32 {strides = array<i32>} : memref<8x32xf32, #tpu.memory_space<vmem>>, vector<8x32xf32>,
    } else {
    }
    return
  }
  func.func @transform_0(%arg0: i32, %arg1: i32) -> (i32, i32) {
    %c0_i32 = arith.constant 0 : i32
    return %arg0, %arg1 : i32, i32
  }
  func.func @transform_1(%arg0: i32, %arg1: i32) -> (i32, i32) {
    %c0_i32 = arith.constant 0 : i32
    %c0_i32_0 = arith.constant 0 : i32
    return %arg0, %c0_i32 : i32, i32
  }
  func.func @transform_2(%arg0: i32, %arg1: i32) -> (i32, i32) {
    %c0_i32 = arith.constant 0 : i32
    %c0_i32_0 = arith.constant 0 : i32
    return %arg1, %c0_i32 : i32, i32
  }
  func.func @transform_3(%arg0: i32, %arg1: i32) -> (i32, i32) {
    %c0_i32 = arith.constant 0 : i32
    %c0_i32_0 = arith.constant 0 : i32
    return %arg0, %c0_i32 : i32, i32
  }
}

</mosaic_0001>

<llo_original>
// kernel: moe_mlp_block.1
$region0: #{moe_mlp_block.1}
  #allocation0 [shape = 'u32[]', space=smem, size = 0x4, offset = 0x4, fixed_abs, tag = 'smem constant byte address 0x4 - core index']
  #allocation1 [shape = 'u32[72,128]{1,0:T(1,128)}', space=vmem, size = 0x9000, scoped, tag = 'internal scratch']
  #allocation2 [shape = 'f32[8,128]{1,0:T(8,128)}', space=vmem, size = 0x1000, scoped, tag = 'scratch operand']
  %s0 = inlined_call_operand.vmem [shape: f32[8,40], index: 0, kind: input, shape index: {}]
  %s1 = inlined_call_operand.vmem [shape: f32[8,4], index: 1, kind: input, shape index: {}]
  %s2 = inlined_call_operand.vmem [shape: f32[40,128], index: 2, kind: input, shape index: {}]
  %s3 = inlined_call_operand.hbm [shape: f32[8,32], index: 3, kind: output, shape index: {}]
  %s4 = sld [smem:[#allocation0]]
  $region30: #{moe_mlp_block.1} parent=0
    _
  %s6 = ssub.s32 1, %s4
  %s7 = scalar_select 0, %s6, %s4
  $region1: #{moe_mlp_block.1} parent=0
    #allocation3 [shape = 'u8[4096]{0}', space=vmem, size = 0x1000, scoped, tag = 'output window, operand 0, single buffered']
    #allocation4 [shape = 's32[1]{0}', space=sflag, size = 0x4, scoped, tag = 'scoped memory for moe_mlp_block.1']
    %8 = vsyncpa [#allocation4], 0
    // Predicated region
    $region2: #{moe_mlp_block.1} parent=1 // pred_check
      _
    $region3: #{moe_mlp_block.1} parent=1 // pred_check_branch
      %10 = sbr.rel (0) target = $region5
    $region4: #{moe_mlp_block.1} parent=1 // pred_region
      _
    $region5: #{moe_mlp_block.1} parent=1 // pred_fallthru
      _
    // Predicated region
    $region6: #{moe_mlp_block.1} parent=1 // pred_check
      _
    $region7: #{moe_mlp_block.1} parent=1 // pred_check_branch
      %12 = sbr.rel (0) target = $region9
    $region8: #{moe_mlp_block.1} parent=1 // pred_region
      _
    $region9: #{moe_mlp_block.1} parent=1 // pred_fallthru
      _
    // Predicated region
    $region10: #{moe_mlp_block.1} parent=1 // pred_check
      _
    $region11: #{moe_mlp_block.1} parent=1 // pred_check_branch
      %14 = sbr.rel (0) target = $region13
    $region12: #{moe_mlp_block.1} parent=1 // pred_region
      _
    $region13: #{moe_mlp_block.1} parent=1 // pred_fallthru
      _
    %p15 = scmp.eq.s32.totalorder 0, 0
    // Predicated region
    $region14: #{moe_mlp_block.1} parent=1 // pred_check
      %p16 = pneg %p15
    $region15: #{moe_mlp_block.1} parent=1 // pred_check_branch
      %18 = sbr.rel (%p16) target = $region17
    $region16: #{moe_mlp_block.1} parent=1 // pred_region
      %19 = vst [vmem:[#allocation2] sm:$0xff] 0.0
    $region17: #{moe_mlp_block.1} parent=1 // pred_fallthru
      _
    %v20 = vld [vmem:[#allocation2] sm:$0xff]
    %v21 = vld [vmem:[%s0] sm:$0xff]
    %v22 = vld [vmem:[%s2] sm:$0xff]
    %v23 = vld [vmem:[%s2 + $0x8] sm:$0xff]
    %v24 = vld [vmem:[%s2 + $0x10] sm:$0xff]
    %v25 = vld [vmem:[%s2 + $0x18] sm:$0xff]
    %v26 = vld [vmem:[%s2 + $0x20] sm:$0xff]
    %vm27 = vcmask 326656
    %v29 = vsel %vm27, %v21, 0
    %31 = vmatpush.msra.mxu0 0.0
    %32 = vmatpush.msra.mxu0 0.0
    %33 = vmatpush.msra.mxu0 0.0
    %34 = vmatpush.msra.mxu0 0.0
    %35 = vmatpush.msra.mxu0 0.0
    %36 = vmatpush.msra.mxu0 0.0
    %37 = vmatpush.msra.mxu0 0.0
    %38 = vmatpush.msra.mxu0 0.0
    %39 = vmatpush.msra.mxu0 0.0
    %40 = vmatpush.msra.mxu0 0.0
    %41 = vmatpush.msra.mxu0 0.0
    %42 = vmatpush.msra.mxu0 %v26
    %43 = vmatpush.msra.mxu0 %v25
    %44 = vmatpush.msra.mxu0 %v24
    %45 = vmatpush.msra.mxu0 %v23
    %46 = vmatpush.msra.mxu0 %v22
    %47 = vmatmul.f32.gmra.mxu0 %v29
    %v48 = vpop.f32.mrf.mxu0
    %v49 = vadd.f32 0.0, %v48
    %50 = vdwg.mxu0
    %v51 = vadd.f32 %v20, %v49
    %52 = vst [vmem:[#allocation2] sm:$0xff] %v51
    // Predicated region
    $region18: #{moe_mlp_block.1} parent=1 // pred_check
      %p53 = pneg %p15
    $region19: #{moe_mlp_block.1} parent=1 // pred_check_branch
      %55 = sbr.rel (%p53) target = $region21
    $region20: #{moe_mlp_block.1} parent=1 // pred_region
      %v56 = vld [vmem:[%s1] sm:$0xff]
      %v57 = vld [vmem:[#allocation2] sm:$0xff]
      %59 = vset.pattern.permute.xlu0 0
      %60 = vperm.xlu0 %59, %v56
      %v61 = vpop.permute.xlu0 %60
      %v63 = vmul.f32 %v57, %v61
      %64 = vset.pattern.permute.xlu0 1
      %65 = vperm.xlu0 %64, %v56
      %v66 = vpop.permute.xlu0 %65
      %v68 = vmul.f32 %v57, %v66
      %70 = vrot.lane.b32.xlu0 %v68, 96
      %v71 = vpop.permute.xlu0 %70
      %v73 = vadd.f32 %v63, %v71
      %74 = vset.pattern.permute.xlu0 2
      %75 = vperm.xlu0 %74, %v56
      %v76 = vpop.permute.xlu0 %75
      %v78 = vmul.f32 %v57, %v76
      %80 = vrot.lane.b32.xlu0 %v78, 64
      %v81 = vpop.permute.xlu0 %80
      %v83 = vadd.f32 %v73, %v81
      %84 = vset.pattern.permute.xlu0 3
      %85 = vperm.xlu0 %84, %v56
      %v86 = vpop.permute.xlu0 %85
      %v88 = vmul.f32 %v57, %v86
      %90 = vrot.lane.b32.xlu0 %v88, 32
      %v91 = vpop.permute.xlu0 %90
      %v93 = vadd.f32 %v83, %v91
      %vm94 = vcmask 261120
      %95 = vst.msk [vmem:[#allocation3] sm:$0xff] %vm94, %v93
    $region21: #{moe_mlp_block.1} parent=1 // pred_fallthru
      _
    // Predicated region
    $region22: #{moe_mlp_block.1} parent=1 // pred_check
      _
    $region23: #{moe_mlp_block.1} parent=1 // pred_check_branch
      %97 = sbr.rel (0) target = $region25
    $region24: #{moe_mlp_block.1} parent=1 // pred_region
      %99 = vsyncadd [#allocation4], 0
      %s101 = sshll.u32 [#allocation3], 4
      %s102 = int_to_ptr.vmem [resolvable:$true] %s101
      %s103 = sshll.u32 %s3, 4
      %s104 = int_to_ptr.hbm [resolvable:$true] %s103
      %106 = dma.vmem_to_hbm [thread:$0]  %s102, 128, %s104, [#allocation4]
    $region25: #{moe_mlp_block.1} parent=1 // pred_fallthru
      _
    // Predicated region
    $region26: #{moe_mlp_block.1} parent=1 // pred_check
      _
    $region27: #{moe_mlp_block.1} parent=1 // pred_check_branch
      %108 = sbr.rel (0) target = $region29
    $region28: #{moe_mlp_block.1} parent=1 // pred_region
      %110 = dma.done [#allocation4], 128
    $region29: #{moe_mlp_block.1} parent=1 // pred_fallthru
      _
    %111 = vsyncpa [#allocation4], 1

</llo_original>
